<compile_context>
chip_gen: v7x
topology: tpu7x:2x2x1
jax: 0.10.0
libtpu: 0.0.40
codegen_flags: <defaults>
</compile_context>

<pallas_src>
import jax
import jax.numpy as jnp
from jax.experimental import pallas as pl
from jax.experimental.pallas import tpu as pltpu


def _mlp_kernel(x_ref, w1_ref, w2_ref, o_ref):
    # Fused hot path, all tiles VMEM-resident: matmul -> ReLU (f32) -> matmul.
    h = jnp.dot(x_ref[...], w1_ref[...], preferred_element_type=jnp.float32)
    h = jnp.maximum(h, 0.0)  # ReLU kept in the f32 accumulator (v5e-safe)
    y = jnp.dot(h.astype(w2_ref.dtype), w2_ref[...],
                preferred_element_type=jnp.float32)
    o_ref[...] = y.astype(o_ref.dtype)


def _round_up(v, m):
    return (v + m - 1) // m * m


def two_layer_net(x, w1, w2, *, tile_n=128, vmem_limit_bytes=None):
    """y = relu(x @ w1) @ w2.

    x: (N, D_in); w1: (D_in, H); w2: (H, D_out)  (transpose of nn.Linear's
    stored (out, in) weight). Returns (N, D_out) in x.dtype.
    """
    N, D_in = x.shape
    H = w1.shape[1]
    D_out = w2.shape[1]
    assert w1.shape == (D_in, H) and w2.shape == (H, D_out)

    dtype = x.dtype
    itemsize = jnp.dtype(dtype).itemsize

    # Lane-dense padding of the last dims to 128 multiples (MXU pays for the
    # full 128 lanes anyway; padded output gives unmasked full-width stores).
    d_in_p = _round_up(D_in, 128)
    h_p = _round_up(H, 128)
    d_out_p = _round_up(D_out, 128)

    # Batch tile: sublane-aligned (8 for f32, 16 for bf16); prefer 128+ rows.
    sub = 16 if itemsize == 2 else 8
    tile_n = max(sub, min(_round_up(tile_n, sub), _round_up(N, sub)))
    n_p = _round_up(N, tile_n)
    grid = (n_p // tile_n,)

    # VMEM budget: resident weights + double-buffered x/out tiles + f32 h.
    weights_bytes = (d_in_p * h_p + h_p * d_out_p) * itemsize
    tiles_bytes = 2 * tile_n * (d_in_p + d_out_p) * itemsize + tile_n * h_p * 4
    need = weights_bytes + tiles_bytes
    if vmem_limit_bytes is None:
        # Explicit scoped limit with headroom; stays inside v7x's 64 MiB VMEM.
        vmem_limit_bytes = min(48 * 1024 * 1024,
                               max(32 * 1024 * 1024, int(1.5 * need)))
    if need > vmem_limit_bytes:
        # TODO(synk): for large D_in/H, add a K-reduction grid axis with a
        # pltpu.VMEM accumulator (init/store under pl.when) instead of keeping
        # both weight matrices fully VMEM-resident.
        raise ValueError(
            f"Weights + tiles ({need} B) exceed VMEM budget "
            f"({vmem_limit_bytes} B); add K-reduction tiling for this size.")

    # Zero-padding is exact: extra D_in cols/rows contribute 0; extra H columns
    # of W1 are 0 -> relu(0)=0 -> multiplied by zero rows of W2; extra D_out
    # columns are sliced off below.
    x_p = jnp.pad(x, ((0, n_p - N), (0, d_in_p - D_in)))
    w1_p = jnp.pad(w1, ((0, d_in_p - D_in), (0, h_p - H)))
    w2_p = jnp.pad(w2, ((0, h_p - H), (0, d_out_p - D_out)))

    cost = pl.CostEstimate(
        flops=2 * N * D_in * H + 2 * N * H * D_out,
        transcendentals=0,
        bytes_accessed=(x.size + w1.size + w2.size + N * D_out) * itemsize,
    )

    out_p = pl.pallas_call(
        _mlp_kernel,
        out_shape=jax.ShapeDtypeStruct((n_p, d_out_p), dtype),
        grid_spec=pltpu.PrefetchScalarGridSpec(
            num_scalar_prefetch=0,
            grid=grid,
            in_specs=[
                # x tile marches over the batch; double-buffered by Pallas.
                pl.BlockSpec((tile_n, d_in_p), lambda i: (i, 0)),
                # Weights: constant block index -> fetched once, VMEM-resident.
                pl.BlockSpec((d_in_p, h_p), lambda i: (0, 0)),
                pl.BlockSpec((h_p, d_out_p), lambda i: (0, 0)),
            ],
            out_specs=pl.BlockSpec((tile_n, d_out_p), lambda i: (i, 0)),
        ),
        compiler_params=pltpu.CompilerParams(
            dimension_semantics=("parallel",),  # megacore sharding on v7x
            vmem_limit_bytes=vmem_limit_bytes,
        ),
        cost_estimate=cost,
    )(x_p, w1_p, w2_p)

    return out_p[:N, :D_out]


if __name__ == "__main__":
    # Small shapes that still exercise the real path: N=200 -> two 128-row
    # batch tiles (grid=(2,)); D_in/H/D_out are lane-padded to 128 inside
    # the wrapper and sliced back afterwards.
    N, D_in, H, D_out = 200, 64, 96, 40

    key = jax.random.PRNGKey(0)
    kx, k1, k2 = jax.random.split(key, 3)

    x = jax.random.normal(kx, (N, D_in), dtype=jnp.float32)
    # nn.Linear stores (out, in); the kernel takes the math-layout transpose.
    b1 = 1.0 / jnp.sqrt(D_in)
    b2 = 1.0 / jnp.sqrt(H)
    w1 = jax.random.uniform(k1, (H, D_in), jnp.float32, -b1, b1)
    w2 = jax.random.uniform(k2, (D_out, H), jnp.float32, -b2, b2)

    # f32 path: exact vs pure-JAX reference.
    y = jax.block_until_ready(two_layer_net(x, w1.T, w2.T))
    y_ref = jnp.maximum(x @ w1.T, 0.0) @ w2.T
    assert y.shape == (N, D_out)
    assert jnp.allclose(y, y_ref, atol=1e-5, rtol=1e-5)

    # bf16 MXU-operand path (v6e/v7x fast path): same kernel, f32 accumulation,
    # looser tolerance due to bf16 operand rounding.
    y_bf16 = jax.block_until_ready(
        two_layer_net(x.astype(jnp.bfloat16),
                      w1.T.astype(jnp.bfloat16),
                      w2.T.astype(jnp.bfloat16)))
    assert jnp.allclose(y_bf16.astype(jnp.float32), y_ref, atol=5e-2, rtol=5e-2)

    print("KERNEL_OK")
</pallas_src>

<mosaic_0001>
module attributes {stable_mosaic.version = 11 : i64} {
  func.func @_mlp_kernel(%arg0: i32, %arg1: memref<128x128xf32, #tpu.memory_space<vmem>>, %arg2: memref<128x128xf32, #tpu.memory_space<vmem>>, %arg3: memref<128x128xf32, #tpu.memory_space<vmem>>, %arg4: memref<128x128xf32, #tpu.memory_space<vmem>>) attributes {dimension_semantics = [#tpu.dimension_semantics<parallel>], iteration_bounds = array<i64: 2>, scalar_prefetch = 0 : i64, scratch_operands = 0 : i64, tpu.core_type = #tpu.core_type<tc>, window_params = [{transform_indices = @transform_0, window_bounds = array<i64: 128, 128>}, {pipeline_mode = #tpu.pipeline_mode<synchronous>, transform_indices = @transform_1, window_bounds = array<i64: 128, 128>}, {pipeline_mode = #tpu.pipeline_mode<synchronous>, transform_indices = @transform_2, window_bounds = array<i64: 128, 128>}, {transform_indices = @transform_3, window_bounds = array<i64: 128, 128>}]} {
    %c0 = arith.constant 0 : index
    %c0_0 = arith.constant 0 : index
    %0 = vector.load %arg1[%c0, %c0_0] : memref<128x128xf32, #tpu.memory_space<vmem>>, vector<128x128xf32>
    %c0_1 = arith.constant 0 : index
    %c0_2 = arith.constant 0 : index
    %1 = vector.load %arg2[%c0_1, %c0_2] : memref<128x128xf32, #tpu.memory_space<vmem>>, vector<128x128xf32>
    %cst = arith.constant dense<0.000000e+00> : vector<128x128xf32>
    %2 = tpu.matmul %0, %1, %cst {dimension_numbers = #tpu.dot_dimension_numbers<[1], [0], [0], [1], [0, 0, 1, 1], [], []>} : vector<128x128xf32>, vector<128x128xf32>, vector<128x128xf32> -> vector<128x128xf32>
    %cst_3 = arith.constant 0.000000e+00 : f32
    %3 = vector.broadcast %cst_3 : f32 to vector<128x128xf32>
    %4 = arith.maximumf %2, %3 : vector<128x128xf32>
    %c0_4 = arith.constant 0 : index
    %c0_5 = arith.constant 0 : index
    %5 = vector.load %arg3[%c0_4, %c0_5] : memref<128x128xf32, #tpu.memory_space<vmem>>, vector<128x128xf32>
    %cst_6 = arith.constant dense<0.000000e+00> : vector<128x128xf32>
    %6 = tpu.matmul %4, %5, %cst_6 {dimension_numbers = #tpu.dot_dimension_numbers<[1], [0], [0], [1], [0, 0, 1, 1], [], []>} : vector<128x128xf32>, vector<128x128xf32>, vector<128x128xf32> -> vector<128x128xf32>
    %c0_7 = arith.constant 0 : index
    %c0_8 = arith.constant 0 : index
    %7 = vector.load %arg4[%c0_7, %c0_8] : memref<128x128xf32, #tpu.memory_space<vmem>>, vector<128x128xf32>
    tpu.vector_store %arg4[%c0_7, %c0_8], %6 {strides = array<i32>} : memref<128x128xf32, #tpu.memory_space<vmem>>, vector<128x128xf32>,
    return
  }
  func.func @transform_0(%arg0: i32) -> (i32, i32) {
    %c0_i32 = arith.constant 0 : i32
    %c0_i32_0 = arith.constant 0 : i32
    return %arg0, %c0_i32 : i32, i32
  }
  func.func @transform_1(%arg0: i32) -> (i32, i32) {
    %c0_i32 = arith.constant 0 : i32
    %c0_i32_0 = arith.constant 0 : i32
    %c0_i32_1 = arith.constant 0 : i32
    return %c0_i32, %c0_i32_0 : i32, i32
  }
  func.func @transform_2(%arg0: i32) -> (i32, i32) {
    %c0_i32 = arith.constant 0 : i32
    %c0_i32_0 = arith.constant 0 : i32
    %c0_i32_1 = arith.constant 0 : i32
    return %c0_i32, %c0_i32_0 : i32, i32
  }
  func.func @transform_3(%arg0: i32) -> (i32, i32) {
    %c0_i32 = arith.constant 0 : i32
    %c0_i32_0 = arith.constant 0 : i32
    return %arg0, %c0_i32 : i32, i32
  }
}

</mosaic_0001>

<llo_original>
// kernel: tpu_custom_call.1
$region0: #{tpu_custom_call.1}
  #allocation0 [shape = 'u32[]', space=smem, size = 0x4, offset = 0x4, fixed_abs, tag = 'smem constant byte address 0x4 - core index']
  #allocation1 [shape = 'u32[144,128]{1,0:T(1,128)}', space=vmem, size = 0x12000, scoped, tag = 'internal scratch']
  %s0 = inlined_call_operand.hbm [shape: f32[256,128], index: 0, kind: input, shape index: {}]
  %s1 = inlined_call_operand.hbm [shape: f32[128,128], index: 1, kind: input, shape index: {}]
  %s2 = inlined_call_operand.hbm [shape: f32[128,128], index: 2, kind: input, shape index: {}]
  %s3 = inlined_call_operand.hbm [shape: f32[256,128], index: 3, kind: output, shape index: {}]
  %s4 = sld [smem:[#allocation0]]
  $region57: #{tpu_custom_call.1} parent=0
    _
  %s6 = ssub.s32 1, %s4
  %s7 = scalar_select 0, %s6, %s4
  $region1: #{tpu_custom_call.1} parent=0
    #allocation2 [shape = 'u8[131072]{0}', space=vmem, size = 0x20000, scoped, tag = 'input window, operand 0']
    #allocation3 [shape = 's32[2]{0}', space=sflag, size = 0x8, scoped, tag = 'scoped memory for tpu_custom_call.1']
    #allocation4 [shape = 's32[2]{0}', space=sflag, size = 0x8, scoped, tag = 'scoped memory for tpu_custom_call.1']
    #allocation5 [shape = 'u8[65536]{0}', space=vmem, size = 0x10000, scoped, tag = 'input window, operand 1, single buffered']
    #allocation6 [shape = 's32[1]{0}', space=sflag, size = 0x4, scoped, tag = 'scoped memory for tpu_custom_call.1']
    #allocation7 [shape = 'u8[65536]{0}', space=vmem, size = 0x10000, scoped, tag = 'input window, operand 2, single buffered']
    #allocation8 [shape = 'u8[131072]{0}', space=vmem, size = 0x20000, scoped, tag = 'output window, operand 0']
    %8 = vsyncpa [#allocation3], 0
    %s9 = scalar_lea.sflag [#allocation3], 1
    %10 = vsyncpa %s9, 0
    %11 = vsyncpa [#allocation6], 0
    %12 = vsyncpa [#allocation4], 0
    %s13 = scalar_lea.sflag [#allocation4], 1
    %14 = vsyncpa %s13, 0
    loop: start=0, step=1, limit=4
    $region2: #{tpu_custom_call.1} parent=1 // loop_pre_header
      _
    $region3: #{tpu_custom_call.1} parent=1 // loop_header
      %s16 = sphi 0, %s20
      %p17 = scmp.ge.s32.totalorder %s16, 4
      %s26 = sphi 0, %s28
      %s29 = sphi 0, %s26
      %s30 = sphi 0, %s29
      %s46 = sphi 0, %s30
      %s50 = sphi 0, %s50
      %s52 = sphi 0, %s50
      %s53 = sphi 0, %s52
      %s67 = sphi 0, %s53
      %s71 = sphi 0, %s71
      %s73 = sphi 0, %s71
      %s74 = sphi 0, %s73
      %s88 = sphi 0, %s74
      %s94 = sphi 0, %s96
      %s97 = sphi 0, %s94
      %s98 = sphi 0, %s97
      %s114 = sphi 0, %s98
    $region4: #{tpu_custom_call.1} parent=1 // loop_header_branch
      %19 = sbr.rel (%p17) target = $region8
    $region5: #{tpu_custom_call.1} parent=1 // loop_body
      %s21 = ssub.s32 %s16, 1
      %s22 = ssub.s32 %s16, 2
      %s23 = sadd.s32 %s16, 1
      %s24 = ssub.s32 %s16, %s23
      %p25 = scmp.eq.s32.totalorder %s24, 0
      %s27 = sadd.s32 %s26, 1
      %s28 = scalar_select %p25, %s26, %s27
      %p31 = pneg %p25
      %p32 = scmp.eq.s32.totalorder %s16, 1
      %p33 = por %p31, %p32
      %p34 = scmp.ne.s32.totalorder %s26, %s29
      %p35 = scmp.eq.s32.totalorder %s16, 0
      %p36 = por %p34, %p35
      %p37 = scmp.ne.s32.totalorder %s26, %s29
      %p38 = scmp.eq.s32.totalorder %s21, 1
      %p39 = por %p37, %p38
      %p40 = scmp.ne.s32.totalorder %s29, %s30
      %p41 = scmp.eq.s32.totalorder %s21, 0
      %p42 = por %p40, %p41
      %p43 = scmp.ne.s32.totalorder %s29, %s30
      %p44 = scmp.eq.s32.totalorder %s22, 1
      %p45 = por %p43, %p44
      %p47 = scmp.ne.s32.totalorder %s30, %s46
      %p48 = scmp.eq.s32.totalorder %s22, 0
      %p49 = por %p47, %p48
      %s51 = sadd.s32 %s50, 1
      %p54 = scmp.eq.s32.totalorder %s16, 1
      %p55 = scmp.ne.s32.totalorder %s50, %s52
      %p56 = scmp.eq.s32.totalorder %s16, 0
      %p57 = por %p55, %p56
      %p58 = scmp.ne.s32.totalorder %s50, %s52
      %p59 = scmp.eq.s32.totalorder %s21, 1
      %p60 = por %p58, %p59
      %p61 = scmp.ne.s32.totalorder %s52, %s53
      %p62 = scmp.eq.s32.totalorder %s21, 0
      %p63 = por %p61, %p62
      %p64 = scmp.ne.s32.totalorder %s52, %s53
      %p65 = scmp.eq.s32.totalorder %s22, 1
      %p66 = por %p64, %p65
      %p68 = scmp.ne.s32.totalorder %s53, %s67
      %p69 = scmp.eq.s32.totalorder %s22, 0
      %p70 = por %p68, %p69
      %s72 = sadd.s32 %s71, 1
      %p75 = scmp.eq.s32.totalorder %s16, 1
      %p76 = scmp.ne.s32.totalorder %s71, %s73
      %p77 = scmp.eq.s32.totalorder %s16, 0
      %p78 = por %p76, %p77
      %p79 = scmp.ne.s32.totalorder %s71, %s73
      %p80 = scmp.eq.s32.totalorder %s21, 1
      %p81 = por %p79, %p80
      %p82 = scmp.ne.s32.totalorder %s73, %s74
      %p83 = scmp.eq.s32.totalorder %s21, 0
      %p84 = por %p82, %p83
      %p85 = scmp.ne.s32.totalorder %s73, %s74
      %p86 = scmp.eq.s32.totalorder %s22, 1
      %p87 = por %p85, %p86
      %p89 = scmp.ne.s32.totalorder %s74, %s88
      %p90 = scmp.eq.s32.totalorder %s22, 0
      %p91 = por %p89, %p90
      %s92 = ssub.s32 %s16, %s23
      %p93 = scmp.eq.s32.totalorder %s92, 0
      %s95 = sadd.s32 %s94, 1
      %s96 = scalar_select %p93, %s94, %s95
      %p99 = pneg %p93
      %p100 = scmp.eq.s32.totalorder %s16, 1
      %p101 = por %p99, %p100
      %p102 = scmp.ne.s32.totalorder %s94, %s97
      %p103 = scmp.eq.s32.totalorder %s16, 0
      %p104 = por %p102, %p103
      %p105 = scmp.ne.s32.totalorder %s94, %s97
      %p106 = scmp.eq.s32.totalorder %s21, 1
      %p107 = por %p105, %p106
      %p108 = scmp.ne.s32.totalorder %s97, %s98
      %p109 = scmp.eq.s32.totalorder %s21, 0
      %p110 = por %p108, %p109
      %p111 = scmp.ne.s32.totalorder %s97, %s98
      %p112 = scmp.eq.s32.totalorder %s22, 1
      %p113 = por %p111, %p112
      %p115 = scmp.ne.s32.totalorder %s98, %s114
      %p116 = scmp.eq.s32.totalorder %s22, 0
      %p117 = por %p115, %p116
      %p118 = scmp.le.s32.totalorder 1, %s16
      %p119 = scmp.lt.s32.totalorder %s16, 3
      %p120 = pnand %p118, %p119
      %p121 = pneg %p120
      // Predicated region
      $region9: #{tpu_custom_call.1} parent=5 // pred_check
        _
      $region10: #{tpu_custom_call.1} parent=5 // pred_check_branch
        %123 = sbr.rel (%p120) target = $region12
      $region11: #{tpu_custom_call.1} parent=5 // pred_region
        %s124 = ssub.s32 %s16, 1
        // Predicated region
        $region13: #{tpu_custom_call.1} parent=11 // pred_check
          %p125 = pneg %p63
        $region14: #{tpu_custom_call.1} parent=11 // pred_check_branch
          %127 = sbr.rel (%p125) target = $region16
        $region15: #{tpu_custom_call.1} parent=11 // pred_region
          %s129 = ssub.s32 2048, 2048
          %130 = vsyncadd [#allocation6], %s129
          %s131 = sshll.u32 [#allocation5], 4
          %s132 = int_to_ptr.vmem [resolvable:$true] %s131
          %137 = dma.hbm_to_vmem [thread:$0]  %s1, 2048, %s132, [#allocation6], 128, 128, 8
        $region16: #{tpu_custom_call.1} parent=11 // pred_fallthru
          _
        // Predicated region
        $region17: #{tpu_custom_call.1} parent=11 // pred_check
          %p138 = pneg %p84
        $region18: #{tpu_custom_call.1} parent=11 // pred_check_branch
          %140 = sbr.rel (%p138) target = $region20
        $region19: #{tpu_custom_call.1} parent=11 // pred_region
          %s142 = ssub.s32 2048, 2048
          %143 = vsyncadd [#allocation6], %s142
          %s144 = sshll.u32 [#allocation7], 4
          %s145 = int_to_ptr.vmem [resolvable:$true] %s144
          %150 = dma.hbm_to_vmem [thread:$0]  %s2, 2048, %s145, [#allocation6], 128, 128, 8
        $region20: #{tpu_custom_call.1} parent=11 // pred_fallthru
          _
      $region12: #{tpu_custom_call.1} parent=5 // pred_fallthru
        _
      %p151 = scmp.lt.s32.totalorder %s16, 2
      // Predicated region
      $region21: #{tpu_custom_call.1} parent=5 // pred_check
        %p152 = pneg %p151
      $region22: #{tpu_custom_call.1} parent=5 // pred_check_branch
        %154 = sbr.rel (%p152) target = $region24
      $region23: #{tpu_custom_call.1} parent=5 // pred_region
        // Predicated region
        $region25: #{tpu_custom_call.1} parent=23 // pred_check
          %p155 = pneg %p36
        $region26: #{tpu_custom_call.1} parent=23 // pred_check_branch
          %157 = sbr.rel (%p155) target = $region28
        $region27: #{tpu_custom_call.1} parent=23 // pred_region
          %s158 = sand.u32 %s26, 1
          %s159 = scalar_lea.sflag [#allocation3], %s158
          %s160 = sand.u32 %s26, 1
          %s161 = smul.addr %s160, 128
          %s162 = scalar_lea.vmem [#allocation2], %s161
          %s163 = smul.u32 16, %s16
          %s165 = ssub.s32 2048, 2048
          %166 = vsyncadd %s159, %s165
          %s167 = smul.addr %s163, 128
          %s168 = scalar_lea.hbm %s0, %s167
          %s169 = sshll.u32 %s162, 4
          %s170 = int_to_ptr.vmem [resolvable:$true] %s169
          %175 = dma.hbm_to_vmem [thread:$0]  %s168, 2048, %s170, %s159, 128, 128, 8
        $region28: #{tpu_custom_call.1} parent=23 // pred_fallthru
          _
      $region24: #{tpu_custom_call.1} parent=5 // pred_fallthru
        _
      %p176 = scmp.le.s32.totalorder 1, %s16
      %p177 = scmp.lt.s32.totalorder %s16, 3
      %p178 = pnand %p176, %p177
      %p179 = pneg %p178
      // Predicated region
      $region29: #{tpu_custom_call.1} parent=5 // pred_check
        _
      $region30: #{tpu_custom_call.1} parent=5 // pred_check_branch
        %181 = sbr.rel (%p178) target = $region32
      $region31: #{tpu_custom_call.1} parent=5 // pred_region
        %s182 = ssub.s32 %s16, 1
        %s183 = sand.u32 %s29, 1
        %s184 = scalar_lea.sflag [#allocation3], %s183
        %s185 = sand.u32 %s29, 1
        %s186 = smul.addr %s185, 128
        %s187 = scalar_lea.vmem [#allocation2], %s186
        // Predicated region
        $region33: #{tpu_custom_call.1} parent=31 // pred_check
          %p188 = pneg %p42
        $region34: #{tpu_custom_call.1} parent=31 // pred_check_branch
          %190 = sbr.rel (%p188) target = $region36
        $region35: #{tpu_custom_call.1} parent=31 // pred_region
          %191 = dma.done %s184, 2048
        $region36: #{tpu_custom_call.1} parent=31 // pred_fallthru
          _
        // Predicated region
        $region37: #{tpu_custom_call.1} parent=31 // pred_check
          %p192 = pneg %p63
        $region38: #{tpu_custom_call.1} parent=31 // pred_check_branch
          %194 = sbr.rel (%p192) target = $region40
        $region39: #{tpu_custom_call.1} parent=31 // pred_region
          %195 = dma.done [#allocation6], 2048
        $region40: #{tpu_custom_call.1} parent=31 // pred_fallthru
          _
        // Predicated region
        $region41: #{tpu_custom_call.1} parent=31 // pred_check
          %p196 = pneg %p84
        $region42: #{tpu_custom_call.1} parent=31 // pred_check_branch
          %198 = sbr.rel (%p196) target = $region44
        $region43: #{tpu_custom_call.1} parent=31 // pred_region
          %199 = dma.done [#allocation6], 2048
        $region44: #{tpu_custom_call.1} parent=31 // pred_fallthru
          _
        %s200 = sand.u32 %s29, 1
        %s201 = scalar_lea.sflag [#allocation3], %s200
        %s202 = sand.u32 %s29, 1
        %s203 = smul.addr %s202, 128
        %s204 = scalar_lea.vmem [#allocation2], %s203
        %p205 = pneg %p42
        %p206 = pneg %p39
        %p207 = pneg %p63
        %p208 = pneg %p60
        %p209 = pneg %p84
        %p210 = pneg %p81
        %p211 = pneg %p110
        %p212 = pneg %p107
        %s213 = sand.u32 %s97, 1
        %s214 = scalar_lea.sflag [#allocation4], %s213
        %s215 = sand.u32 %s97, 1
        %s216 = smul.addr %s215, 128
        %s217 = scalar_lea.vmem [#allocation8], %s216
        %s218 = smul.u32 16, %s21
        %s219 = smul.u32 16, %s21
        %v220 = vld [vmem:[%s187] sm:$0xff]
        %v221 = vld [vmem:[%s187 + $0x8] sm:$0xff]
        %v222 = vld [vmem:[%s187 + $0x10] sm:$0xff]
        %v223 = vld [vmem:[%s187 + $0x18] sm:$0xff]
        %v224 = vld [vmem:[%s187 + $0x20] sm:$0xff]
        %v225 = vld [vmem:[%s187 + $0x28] sm:$0xff]
        %v226 = vld [vmem:[%s187 + $0x30] sm:$0xff]
        %v227 = vld [vmem:[%s187 + $0x38] sm:$0xff]
        %v228 = vld [vmem:[%s187 + $0x40] sm:$0xff]
        %v229 = vld [vmem:[%s187 + $0x48] sm:$0xff]
        %v230 = vld [vmem:[%s187 + $0x50] sm:$0xff]
        %v231 = vld [vmem:[%s187 + $0x58] sm:$0xff]
        %v232 = vld [vmem:[%s187 + $0x60] sm:$0xff]
        %v233 = vld [vmem:[%s187 + $0x68] sm:$0xff]
        %v234 = vld [vmem:[%s187 + $0x70] sm:$0xff]
        %v235 = vld [vmem:[%s187 + $0x78] sm:$0xff]
        %v236 = vld [vmem:[#allocation5] sm:$0xff]
        %v237 = vld [vmem:[#allocation5 + $0x8] sm:$0xff]
        %v238 = vld [vmem:[#allocation5 + $0x10] sm:$0xff]
        %v239 = vld [vmem:[#allocation5 + $0x18] sm:$0xff]
        %v240 = vld [vmem:[#allocation5 + $0x20] sm:$0xff]
        %v241 = vld [vmem:[#allocation5 + $0x28] sm:$0xff]
        %v242 = vld [vmem:[#allocation5 + $0x30] sm:$0xff]
        %v243 = vld [vmem:[#allocation5 + $0x38] sm:$0xff]
        %v244 = vld [vmem:[#allocation5 + $0x40] sm:$0xff]
        %v245 = vld [vmem:[#allocation5 + $0x48] sm:$0xff]
        %v246 = vld [vmem:[#allocation5 + $0x50] sm:$0xff]
        %v247 = vld [vmem:[#allocation5 + $0x58] sm:$0xff]
        %v248 = vld [vmem:[#allocation5 + $0x60] sm:$0xff]
        %v249 = vld [vmem:[#allocation5 + $0x68] sm:$0xff]
        %v250 = vld [vmem:[#allocation5 + $0x70] sm:$0xff]
        %v251 = vld [vmem:[#allocation5 + $0x78] sm:$0xff]
        %252 = vmatprep.subr.mxu0 0.0
        %253 = vmatpush1.msra.mxu0 %v236
        %254 = vmatprep.subr.mxu0 0.0
        %255 = vmatpush1.msra.mxu0 %v237
        %256 = vmatprep.subr.mxu0 0.0
        %257 = vmatpush1.msra.mxu0 %v238
        %258 = vmatprep.subr.mxu0 0.0
        %259 = vmatpush1.msra.mxu0 %v239
        %260 = vmatprep.subr.mxu0 0.0
        %261 = vmatpush1.msra.mxu0 %v240
        %262 = vmatprep.subr.mxu0 0.0
        %263 = vmatpush1.msra.mxu0 %v241
        %264 = vmatprep.subr.mxu0 0.0
        %265 = vmatpush1.msra.mxu0 %v242
        %266 = vmatprep.subr.mxu0 0.0
        %267 = vmatpush1.msra.mxu0 %v243
        %268 = vmatprep.subr.mxu0 0.0
        %269 = vmatpush1.msra.mxu0 %v244
        %270 = vmatprep.subr.mxu0 0.0
        %271 = vmatpush1.msra.mxu0 %v245
        %272 = vmatprep.subr.mxu0 0.0
        %273 = vmatpush1.msra.mxu0 %v246
        %274 = vmatprep.subr.mxu0 0.0
        %275 = vmatpush1.msra.mxu0 %v247
        %276 = vmatprep.subr.mxu0 0.0
        %277 = vmatpush1.msra.mxu0 %v248
        %278 = vmatprep.subr.mxu0 0.0
        %279 = vmatpush1.msra.mxu0 %v249
        %280 = vmatprep.subr.mxu0 0.0
        %281 = vmatpush1.msra.mxu0 %v250
        %282 = vmatprep.subr.mxu0 0.0
        %283 = vmatpush1.msra.mxu0 %v251
        %284 = vmatprep.subr.mxu0 0.0
        %285 = vmatpush1.msra.mxu0 0.0
        %286 = vmatprep.subr.mxu0 0.0
        %287 = vmatpush1.msra.mxu0 0.0
        %288 = vmatprep.subr.mxu0 0.0
        %289 = vmatpush1.msra.mxu0 0.0
        %290 = vmatprep.subr.mxu0 0.0
        %291 = vmatpush1.msra.mxu0 0.0
        %292 = vmatprep.subr.mxu0 0.0
        %293 = vmatpush1.msra.mxu0 0.0
        %294 = vmatprep.subr.mxu0 0.0
        %295 = vmatpush1.msra.mxu0 0.0
        %296 = vmatprep.subr.mxu0 0.0
        %297 = vmatpush1.msra.mxu0 0.0
        %298 = vmatprep.subr.mxu0 0.0
        %299 = vmatpush1.msra.mxu0 0.0
        %300 = vmatprep.subr.mxu0 0.0
        %301 = vmatpush1.msra.mxu0 0.0
        %302 = vmatprep.subr.mxu0 0.0
        %303 = vmatpush1.msra.mxu0 0.0
        %304 = vmatprep.subr.mxu0 0.0
        %305 = vmatpush1.msra.mxu0 0.0
        %306 = vmatprep.subr.mxu0 0.0
        %307 = vmatpush1.msra.mxu0 0.0
        %308 = vmatprep.subr.mxu0 0.0
        %309 = vmatpush1.msra.mxu0 0.0
        %310 = vmatprep.subr.mxu0 0.0
        %311 = vmatpush1.msra.mxu0 0.0
        %312 = vmatprep.subr.mxu0 0.0
        %313 = vmatpush1.msra.mxu0 0.0
        %314 = vmatprep.subr.mxu0 0.0
        %315 = vmatpush1.msra.mxu0 0.0
        %316 = vmatprep.mubr.f32.mxu0 0.0
        %317 = vmatmul.mubr.f32.gmra.mrb[0].mxu0 %v220
        %v318 = vpop.f32.mrb[0].mxu0
        %v319 = vadd.f32 0.0, %v318
        %v320 = vpop.f32.mrb[0].mxu0
        %321 = vmatprep.mubr.f32.mxu0 0.0
        %322 = vmatmul.mubr.f32.gmra.mrb[0].mxu0 %v221
        %v323 = vpop.f32.mrb[0].mxu0
        %v324 = vadd.f32 0.0, %v323
        %v325 = vpop.f32.mrb[0].mxu0
        %326 = vmatprep.mubr.f32.mxu0 0.0
        %327 = vmatmul.mubr.f32.gmra.mrb[0].mxu0 %v222
        %v328 = vpop.f32.mrb[0].mxu0
        %v329 = vadd.f32 0.0, %v328
        %v330 = vpop.f32.mrb[0].mxu0
        %331 = vmatprep.mubr.f32.mxu0 0.0
        %332 = vmatmul.mubr.f32.gmra.mrb[0].mxu0 %v223
        %v333 = vpop.f32.mrb[0].mxu0
        %v334 = vadd.f32 0.0, %v333
        %v335 = vpop.f32.mrb[0].mxu0
        %336 = vmatprep.mubr.f32.mxu0 0.0
        %337 = vmatmul.mubr.f32.gmra.mrb[0].mxu0 %v224
        %v338 = vpop.f32.mrb[0].mxu0
        %v339 = vadd.f32 0.0, %v338
        %v340 = vpop.f32.mrb[0].mxu0
        %341 = vmatprep.mubr.f32.mxu0 0.0
        %342 = vmatmul.mubr.f32.gmra.mrb[0].mxu0 %v225
        %v343 = vpop.f32.mrb[0].mxu0
        %v344 = vadd.f32 0.0, %v343
        %v345 = vpop.f32.mrb[0].mxu0
        %346 = vmatprep.mubr.f32.mxu0 0.0
        %347 = vmatmul.mubr.f32.gmra.mrb[0].mxu0 %v226
        %v348 = vpop.f32.mrb[0].mxu0
        %v349 = vadd.f32 0.0, %v348
        %v350 = vpop.f32.mrb[0].mxu0
        %351 = vmatprep.mubr.f32.mxu0 0.0
        %352 = vmatmul.mubr.f32.gmra.mrb[0].mxu0 %v227
        %v353 = vpop.f32.mrb[0].mxu0
        %v354 = vadd.f32 0.0, %v353
        %v355 = vpop.f32.mrb[0].mxu0
        %356 = vmatprep.mubr.f32.mxu0 0.0
        %357 = vmatmul.mubr.f32.gmra.mrb[0].mxu0 %v228
        %v358 = vpop.f32.mrb[0].mxu0
        %v359 = vadd.f32 0.0, %v358
        %v360 = vpop.f32.mrb[0].mxu0
        %361 = vmatprep.mubr.f32.mxu0 0.0
        %362 = vmatmul.mubr.f32.gmra.mrb[0].mxu0 %v229
        %v363 = vpop.f32.mrb[0].mxu0
        %v364 = vadd.f32 0.0, %v363
        %v365 = vpop.f32.mrb[0].mxu0
        %366 = vmatprep.mubr.f32.mxu0 0.0
        %367 = vmatmul.mubr.f32.gmra.mrb[0].mxu0 %v230
        %v368 = vpop.f32.mrb[0].mxu0
        %v369 = vadd.f32 0.0, %v368
        %v370 = vpop.f32.mrb[0].mxu0
        %371 = vmatprep.mubr.f32.mxu0 0.0
        %372 = vmatmul.mubr.f32.gmra.mrb[0].mxu0 %v231
        %v373 = vpop.f32.mrb[0].mxu0
        %v374 = vadd.f32 0.0, %v373
        %v375 = vpop.f32.mrb[0].mxu0
        %376 = vmatprep.mubr.f32.mxu0 0.0
        %377 = vmatmul.mubr.f32.gmra.mrb[0].mxu0 %v232
        %v378 = vpop.f32.mrb[0].mxu0
        %v379 = vadd.f32 0.0, %v378
        %v380 = vpop.f32.mrb[0].mxu0
        %381 = vmatprep.mubr.f32.mxu0 0.0
        %382 = vmatmul.mubr.f32.gmra.mrb[0].mxu0 %v233
        %v383 = vpop.f32.mrb[0].mxu0
        %v384 = vadd.f32 0.0, %v383
        %v385 = vpop.f32.mrb[0].mxu0
        %386 = vmatprep.mubr.f32.mxu0 0.0
        %387 = vmatmul.mubr.f32.gmra.mrb[0].mxu0 %v234
        %v388 = vpop.f32.mrb[0].mxu0
        %v389 = vadd.f32 0.0, %v388
        %v390 = vpop.f32.mrb[0].mxu0
        %391 = vmatprep.mubr.f32.mxu0 0.0
        %392 = vmatmul.mubr.f32.gmra.mrb[0].mxu0 %v235
        %v393 = vpop.f32.mrb[0].mxu0
        %v394 = vadd.f32 0.0, %v393
        %v395 = vpop.f32.mrb[0].mxu0
        %396 = vdwg.mxu0
        %v397 = vmax.f32 %v319, 0.0
        %v398 = vmax.f32 %v324, 0.0
        %v399 = vmax.f32 %v329, 0.0
        %v400 = vmax.f32 %v334, 0.0
        %v401 = vmax.f32 %v339, 0.0
        %v402 = vmax.f32 %v344, 0.0
        %v403 = vmax.f32 %v349, 0.0
        %v404 = vmax.f32 %v354, 0.0
        %v405 = vmax.f32 %v359, 0.0
        %v406 = vmax.f32 %v364, 0.0
        %v407 = vmax.f32 %v369, 0.0
        %v408 = vmax.f32 %v374, 0.0
        %v409 = vmax.f32 %v379, 0.0
        %v410 = vmax.f32 %v384, 0.0
        %v411 = vmax.f32 %v389, 0.0
        %v412 = vmax.f32 %v394, 0.0
        %v413 = vld [vmem:[#allocation7] sm:$0xff]
        %v414 = vld [vmem:[#allocation7 + $0x8] sm:$0xff]
        %v415 = vld [vmem:[#allocation7 + $0x10] sm:$0xff]
        %v416 = vld [vmem:[#allocation7 + $0x18] sm:$0xff]
        %v417 = vld [vmem:[#allocation7 + $0x20] sm:$0xff]
        %v418 = vld [vmem:[#allocation7 + $0x28] sm:$0xff]
        %v419 = vld [vmem:[#allocation7 + $0x30] sm:$0xff]
        %v420 = vld [vmem:[#allocation7 + $0x38] sm:$0xff]
        %v421 = vld [vmem:[#allocation7 + $0x40] sm:$0xff]
        %v422 = vld [vmem:[#allocation7 + $0x48] sm:$0xff]
        %v423 = vld [vmem:[#allocation7 + $0x50] sm:$0xff]
        %v424 = vld [vmem:[#allocation7 + $0x58] sm:$0xff]
        %v425 = vld [vmem:[#allocation7 + $0x60] sm:$0xff]
        %v426 = vld [vmem:[#allocation7 + $0x68] sm:$0xff]
        %v427 = vld [vmem:[#allocation7 + $0x70] sm:$0xff]
        %v428 = vld [vmem:[#allocation7 + $0x78] sm:$0xff]
        %429 = vmatprep.subr.mxu0 0.0
        %430 = vmatpush1.msra.mxu0 %v413
        %431 = vmatprep.subr.mxu0 0.0
        %432 = vmatpush1.msra.mxu0 %v414
        %433 = vmatprep.subr.mxu0 0.0
        %434 = vmatpush1.msra.mxu0 %v415
        %435 = vmatprep.subr.mxu0 0.0
        %436 = vmatpush1.msra.mxu0 %v416
        %437 = vmatprep.subr.mxu0 0.0
        %438 = vmatpush1.msra.mxu0 %v417
        %439 = vmatprep.subr.mxu0 0.0
        %440 = vmatpush1.msra.mxu0 %v418
        %441 = vmatprep.subr.mxu0 0.0
        %442 = vmatpush1.msra.mxu0 %v419
        %443 = vmatprep.subr.mxu0 0.0
        %444 = vmatpush1.msra.mxu0 %v420
        %445 = vmatprep.subr.mxu0 0.0
        %446 = vmatpush1.msra.mxu0 %v421
        %447 = vmatprep.subr.mxu0 0.0
        %448 = vmatpush1.msra.mxu0 %v422
        %449 = vmatprep.subr.mxu0 0.0
        %450 = vmatpush1.msra.mxu0 %v423
        %451 = vmatprep.subr.mxu0 0.0
        %452 = vmatpush1.msra.mxu0 %v424
        %453 = vmatprep.subr.mxu0 0.0
        %454 = vmatpush1.msra.mxu0 %v425
        %455 = vmatprep.subr.mxu0 0.0
        %456 = vmatpush1.msra.mxu0 %v426
        %457 = vmatprep.subr.mxu0 0.0
        %458 = vmatpush1.msra.mxu0 %v427
        %459 = vmatprep.subr.mxu0 0.0
        %460 = vmatpush1.msra.mxu0 %v428
        %461 = vmatprep.subr.mxu0 0.0
        %462 = vmatpush1.msra.mxu0 0.0
        %463 = vmatprep.subr.mxu0 0.0
        %464 = vmatpush1.msra.mxu0 0.0
        %465 = vmatprep.subr.mxu0 0.0
        %466 = vmatpush1.msra.mxu0 0.0
        %467 = vmatprep.subr.mxu0 0.0
        %468 = vmatpush1.msra.mxu0 0.0
        %469 = vmatprep.subr.mxu0 0.0
        %470 = vmatpush1.msra.mxu0 0.0
        %471 = vmatprep.subr.mxu0 0.0
        %472 = vmatpush1.msra.mxu0 0.0
        %473 = vmatprep.subr.mxu0 0.0
        %474 = vmatpush1.msra.mxu0 0.0
        %475 = vmatprep.subr.mxu0 0.0
        %476 = vmatpush1.msra.mxu0 0.0
        %477 = vmatprep.subr.mxu0 0.0
        %478 = vmatpush1.msra.mxu0 0.0
        %479 = vmatprep.subr.mxu0 0.0
        %480 = vmatpush1.msra.mxu0 0.0
        %481 = vmatprep.subr.mxu0 0.0
        %482 = vmatpush1.msra.mxu0 0.0
        %483 = vmatprep.subr.mxu0 0.0
        %484 = vmatpush1.msra.mxu0 0.0
        %485 = vmatprep.subr.mxu0 0.0
        %486 = vmatpush1.msra.mxu0 0.0
        %487 = vmatprep.subr.mxu0 0.0
        %488 = vmatpush1.msra.mxu0 0.0
        %489 = vmatprep.subr.mxu0 0.0
        %490 = vmatpush1.msra.mxu0 0.0
        %491 = vmatprep.subr.mxu0 0.0
        %492 = vmatpush1.msra.mxu0 0.0
        %493 = vmatprep.mubr.f32.mxu0 0.0
        %494 = vmatmul.mubr.f32.gmra.mrb[0].mxu0 %v397
        %v495 = vpop.f32.mrb[0].mxu0
        %v496 = vadd.f32 0.0, %v495
        %v497 = vpop.f32.mrb[0].mxu0
        %498 = vmatprep.mubr.f32.mxu0 0.0
        %499 = vmatmul.mubr.f32.gmra.mrb[0].mxu0 %v398
        %v500 = vpop.f32.mrb[0].mxu0
        %v501 = vadd.f32 0.0, %v500
        %v502 = vpop.f32.mrb[0].mxu0
        %503 = vmatprep.mubr.f32.mxu0 0.0
        %504 = vmatmul.mubr.f32.gmra.mrb[0].mxu0 %v399
        %v505 = vpop.f32.mrb[0].mxu0
        %v506 = vadd.f32 0.0, %v505
        %v507 = vpop.f32.mrb[0].mxu0
        %508 = vmatprep.mubr.f32.mxu0 0.0
        %509 = vmatmul.mubr.f32.gmra.mrb[0].mxu0 %v400
        %v510 = vpop.f32.mrb[0].mxu0
        %v511 = vadd.f32 0.0, %v510
        %v512 = vpop.f32.mrb[0].mxu0
        %513 = vmatprep.mubr.f32.mxu0 0.0
        %514 = vmatmul.mubr.f32.gmra.mrb[0].mxu0 %v401
        %v515 = vpop.f32.mrb[0].mxu0
        %v516 = vadd.f32 0.0, %v515
        %v517 = vpop.f32.mrb[0].mxu0
        %518 = vmatprep.mubr.f32.mxu0 0.0
        %519 = vmatmul.mubr.f32.gmra.mrb[0].mxu0 %v402
        %v520 = vpop.f32.mrb[0].mxu0
        %v521 = vadd.f32 0.0, %v520
        %v522 = vpop.f32.mrb[0].mxu0
        %523 = vmatprep.mubr.f32.mxu0 0.0
        %524 = vmatmul.mubr.f32.gmra.mrb[0].mxu0 %v403
        %v525 = vpop.f32.mrb[0].mxu0
        %v526 = vadd.f32 0.0, %v525
        %v527 = vpop.f32.mrb[0].mxu0
        %528 = vmatprep.mubr.f32.mxu0 0.0
        %529 = vmatmul.mubr.f32.gmra.mrb[0].mxu0 %v404
        %v530 = vpop.f32.mrb[0].mxu0
        %v531 = vadd.f32 0.0, %v530
        %v532 = vpop.f32.mrb[0].mxu0
        %533 = vmatprep.mubr.f32.mxu0 0.0
        %534 = vmatmul.mubr.f32.gmra.mrb[0].mxu0 %v405
        %v535 = vpop.f32.mrb[0].mxu0
        %v536 = vadd.f32 0.0, %v535
        %v537 = vpop.f32.mrb[0].mxu0
        %538 = vmatprep.mubr.f32.mxu0 0.0
        %539 = vmatmul.mubr.f32.gmra.mrb[0].mxu0 %v406
        %v540 = vpop.f32.mrb[0].mxu0
        %v541 = vadd.f32 0.0, %v540
        %v542 = vpop.f32.mrb[0].mxu0
        %543 = vmatprep.mubr.f32.mxu0 0.0
        %544 = vmatmul.mubr.f32.gmra.mrb[0].mxu0 %v407
        %v545 = vpop.f32.mrb[0].mxu0
        %v546 = vadd.f32 0.0, %v545
        %v547 = vpop.f32.mrb[0].mxu0
        %548 = vmatprep.mubr.f32.mxu0 0.0
        %549 = vmatmul.mubr.f32.gmra.mrb[0].mxu0 %v408
        %v550 = vpop.f32.mrb[0].mxu0
        %v551 = vadd.f32 0.0, %v550
        %v552 = vpop.f32.mrb[0].mxu0
        %553 = vmatprep.mubr.f32.mxu0 0.0
        %554 = vmatmul.mubr.f32.gmra.mrb[0].mxu0 %v409
        %v555 = vpop.f32.mrb[0].mxu0
        %v556 = vadd.f32 0.0, %v555
        %v557 = vpop.f32.mrb[0].mxu0
        %558 = vmatprep.mubr.f32.mxu0 0.0
        %559 = vmatmul.mubr.f32.gmra.mrb[0].mxu0 %v410
        %v560 = vpop.f32.mrb[0].mxu0
        %v561 = vadd.f32 0.0, %v560
        %v562 = vpop.f32.mrb[0].mxu0
        %563 = vmatprep.mubr.f32.mxu0 0.0
        %564 = vmatmul.mubr.f32.gmra.mrb[0].mxu0 %v411
        %v565 = vpop.f32.mrb[0].mxu0
        %v566 = vadd.f32 0.0, %v565
        %v567 = vpop.f32.mrb[0].mxu0
        %568 = vmatprep.mubr.f32.mxu0 0.0
        %569 = vmatmul.mubr.f32.gmra.mrb[0].mxu0 %v412
        %v570 = vpop.f32.mrb[0].mxu0
        %v571 = vadd.f32 0.0, %v570
        %v572 = vpop.f32.mrb[0].mxu0
        %573 = vdwg.mxu0
        %574 = vst [vmem:[%s217] sm:$0xff] %v496
        %575 = vst [vmem:[%s217 + $0x8] sm:$0xff] %v501
        %576 = vst [vmem:[%s217 + $0x10] sm:$0xff] %v506
        %577 = vst [vmem:[%s217 + $0x18] sm:$0xff] %v511
        %578 = vst [vmem:[%s217 + $0x20] sm:$0xff] %v516
        %579 = vst [vmem:[%s217 + $0x28] sm:$0xff] %v521
        %580 = vst [vmem:[%s217 + $0x30] sm:$0xff] %v526
        %581 = vst [vmem:[%s217 + $0x38] sm:$0xff] %v531
        %582 = vst [vmem:[%s217 + $0x40] sm:$0xff] %v536
        %583 = vst [vmem:[%s217 + $0x48] sm:$0xff] %v541
        %584 = vst [vmem:[%s217 + $0x50] sm:$0xff] %v546
        %585 = vst [vmem:[%s217 + $0x58] sm:$0xff] %v551
        %586 = vst [vmem:[%s217 + $0x60] sm:$0xff] %v556
        %587 = vst [vmem:[%s217 + $0x68] sm:$0xff] %v561
        %588 = vst [vmem:[%s217 + $0x70] sm:$0xff] %v566
        %589 = vst [vmem:[%s217 + $0x78] sm:$0xff] %v571
        %s590 = sand.u32 %s97, 1
        %s591 = scalar_lea.sflag [#allocation4], %s590
        %s592 = sand.u32 %s97, 1
        %s593 = smul.addr %s592, 128
        %s594 = scalar_lea.vmem [#allocation8], %s593
        // Predicated region
        $region45: #{tpu_custom_call.1} parent=31 // pred_check
          %p595 = pneg %p107
        $region46: #{tpu_custom_call.1} parent=31 // pred_check_branch
          %597 = sbr.rel (%p595) target = $region48
        $region47: #{tpu_custom_call.1} parent=31 // pred_region
          %s598 = smul.u32 16, %s21
          %s600 = ssub.s32 2048, 2048
          %601 = vsyncadd %s591, %s600
          %s602 = smul.addr %s598, 128
          %s603 = scalar_lea.hbm %s3, %s602
          %s604 = sshll.u32 %s594, 4
          %s605 = int_to_ptr.vmem [resolvable:$true] %s604
          %610 = dma.vmem_to_hbm [thread:$0]  %s605, 2048, %s603, %s591, 128, 128, 8
        $region48: #{tpu_custom_call.1} parent=31 // pred_fallthru
          _
      $region32: #{tpu_custom_call.1} parent=5 // pred_fallthru
        _
      %p611 = scmp.le.s32.totalorder 2, %s16
      // Predicated region
      $region49: #{tpu_custom_call.1} parent=5 // pred_check
        %p612 = pneg %p611
      $region50: #{tpu_custom_call.1} parent=5 // pred_check_branch
        %614 = sbr.rel (%p612) target = $region52
      $region51: #{tpu_custom_call.1} parent=5 // pred_region
        %s615 = ssub.s32 %s16, 2
        // Predicated region
        $region53: #{tpu_custom_call.1} parent=51 // pred_check
          %p616 = pneg %p113
        $region54: #{tpu_custom_call.1} parent=51 // pred_check_branch
          %618 = sbr.rel (%p616) target = $region56
        $region55: #{tpu_custom_call.1} parent=51 // pred_region
          %s619 = sand.u32 %s98, 1
          %s620 = scalar_lea.sflag [#allocation4], %s619
          %s621 = sand.u32 %s98, 1
          %s622 = smul.addr %s621, 128
          %s623 = scalar_lea.vmem [#allocation8], %s622
          %624 = dma.done %s620, 2048
        $region56: #{tpu_custom_call.1} parent=51 // pred_fallthru
          _
      $region52: #{tpu_custom_call.1} parent=5 // pred_fallthru
        _
    $region6: #{tpu_custom_call.1} parent=1 // loop_footer
      %s20 = sadd.s32 1, %s16
    $region7: #{tpu_custom_call.1} parent=1 // loop_footer_branch
      %15 = sbr.rel target = $region3
    $region8: #{tpu_custom_call.1} parent=1 // loop_exit
      _
    %625 = vsyncpa [#allocation3], 1
    %s626 = scalar_lea.sflag [#allocation3], 1
    %627 = vsyncpa %s626, 1
    %628 = vsyncpa [#allocation6], 1
    %629 = vsyncpa [#allocation4], 1
    %s630 = scalar_lea.sflag [#allocation4], 1
    %631 = vsyncpa %s630, 1

</llo_original>
